<compile_context>
chip_gen: v7x
topology: tpu7x:2x2x1
jax: 0.10.0
libtpu: 0.0.40
codegen_flags: <defaults>
</compile_context>

<pallas_src>
import functools

import jax
import jax.numpy as jnp
from jax import lax
from jax.experimental import pallas as pl
from jax.experimental.pallas import tpu as pltpu

LANE_WIDTHS = (1024, 512, 256, 128)


def _chip_config():
    """Generation-aware knobs: (num_cores, block_bytes, vmem_limit_bytes)."""
    kind = ""
    try:
        kind = jax.devices()[0].device_kind.lower()
    except Exception:
        pass
    mib = 1024 * 1024
    if "v7" in kind or "7x" in kind:
        # 2 TCs/chip, 64 MiB VMEM/TC, ~3.2 TB/s: 8 MiB blocks, 2-way core split.
        return 2, 8 * mib, 48 * mib
    if "v6" in kind:
        # 1 TC, 128 MiB VMEM, ~1.4 TB/s: 16 MiB blocks.
        return 1, 16 * mib, 96 * mib
    if "v5" in kind:
        # ~820 GB/s: 8 MiB blocks already amortize the per-step overhead.
        return 1, 8 * mib, 48 * mib
    return 1, 8 * mib, 48 * mib


NUM_CORES, BLOCK_BYTES, VMEM_LIMIT = _chip_config()


def _mse_partial_kernel(p_ref, t_ref, out_ref, *, k_inner, block_rows,
                        total_rows, needs_mask):
    c = pl.program_id(0)   # core / parallel axis
    i = pl.program_id(1)   # reduction axis

    @pl.when(i == 0)
    def _init():
        out_ref[...] = jnp.zeros_like(out_ref)

    def accumulate(mask_rows):
        d = p_ref[...].astype(jnp.float32) - t_ref[...].astype(jnp.float32)
        sq = d * d
        if mask_rows:
            row0 = (c * k_inner + i) * block_rows
            ridx = row0 + lax.broadcasted_iota(jnp.int32, sq.shape, 0)
            # Select AFTER the square so garbage rows (partial edge tile or
            # the clamped duplicate block) cannot leak NaN/Inf into the sum.
            sq = jnp.where(ridx < total_rows, sq, 0.0)
        # Lane-dense partial sum: reduce over the sublane axis only; the
        # single cross-lane reduction happens once, in the wrapper.
        out_ref[...] += jnp.sum(sq, axis=0, keepdims=True).reshape(out_ref.shape)

    if not needs_mask:
        accumulate(False)
    else:
        row0 = (c * k_inner + i) * block_rows
        is_edge = row0 + block_rows > total_rows

        @pl.when(jnp.logical_not(is_edge))
        def _hot():
            accumulate(False)

        @pl.when(is_edge)
        def _edge():
            accumulate(True)


def _mse_sum_prefix(p2, t2, rows, w):
    """Sum of squared differences over a (rows, w) view via the Pallas kernel."""
    itemsize = p2.dtype.itemsize
    packing = max(8, 32 // itemsize)              # 8 f32 / 16 bf16 / 32 int8
    block_rows = (BLOCK_BYTES // itemsize) // w   # constant bytes per step
    if block_rows >= rows:
        block_rows = rows                         # full extent (always legal)
    else:
        block_rows = max(packing, (block_rows // packing) * packing)

    num_blocks = pl.cdiv(rows, block_rows)
    k_inner = pl.cdiv(num_blocks, NUM_CORES)
    covered = NUM_CORES * k_inner * block_rows
    needs_mask = covered != rows

    def in_map(c, i):
        # Clamp so a trailing duplicate block (odd block count across cores)
        # never DMAs out of bounds; its contribution is masked to zero.
        return (jnp.minimum(c * k_inner + i, num_blocks - 1), 0)

    kernel = functools.partial(
        _mse_partial_kernel,
        k_inner=k_inner,
        block_rows=block_rows,
        total_rows=rows,
        needs_mask=needs_mask,
    )

    partials = pl.pallas_call(
        kernel,
        out_shape=jax.ShapeDtypeStruct((NUM_CORES, 1, w), jnp.float32),
        grid_spec=pltpu.PrefetchScalarGridSpec(
            num_scalar_prefetch=0,
            grid=(NUM_CORES, k_inner),
            in_specs=[
                pl.BlockSpec((block_rows, w), in_map),
                pl.BlockSpec((block_rows, w), in_map),
            ],
            out_specs=pl.BlockSpec((1, 1, w), lambda c, i: (c, 0, 0)),
        ),
        compiler_params=pltpu.CompilerParams(
            dimension_semantics=("parallel", "arbitrary"),
            vmem_limit_bytes=VMEM_LIMIT,
        ),
    )(p2, t2)

    return jnp.sum(partials)


@jax.jit
def mse_loss(pred, target):
    """Pallas equivalent of torch.nn.MSELoss()(pred, target) ('mean')."""
    assert pred.shape == target.shape, "shapes must match (no broadcasting)"
    n = pred.size

    p = pred.reshape(-1)
    t = target.reshape(-1)

    # Widest lane width that divides the flat length => whole tensor in-kernel.
    w = None
    for cand in LANE_WIDTHS:
        if n % cand == 0:
            w = cand
            break
    if w is None:
        w = 128
    prefix = (n // w) * w      # largest lane-aligned prefix (no pad copy)
    tail = n - prefix          # < 128 leftover elements, reduced in plain jnp

    total = jnp.float32(0.0)
    if prefix > 0:
        rows = prefix // w
        total = total + _mse_sum_prefix(
            p[:prefix].reshape(rows, w), t[:prefix].reshape(rows, w), rows, w)
    if tail > 0:
        dt = p[prefix:].astype(jnp.float32) - t[prefix:].astype(jnp.float32)
        total = total + jnp.sum(dt * dt)

    # nn.MSELoss returns a 0-d tensor in the input dtype.
    return (total / jnp.float32(n)).astype(pred.dtype)


if __name__ == "__main__":
    key = jax.random.PRNGKey(0)
    k1, k2 = jax.random.split(key)

    # Small NCHW prediction/target pair.
    pred = jax.random.normal(k1, (2, 4, 16, 16), dtype=jnp.float32)
    target = jax.random.normal(k2, (2, 4, 16, 16), dtype=jnp.float32)

    out = mse_loss(pred, target)
    jax.block_until_ready(out)

    # Reference check against plain JAX (same semantics as nn.MSELoss 'mean').
    ref = jnp.mean((pred - target) ** 2)
    assert jnp.allclose(out, ref, rtol=1e-5, atol=1e-6), (out, ref)

    print("KERNEL_OK")
</pallas_src>

<mosaic_0001>
module attributes {stable_mosaic.version = 11 : i64} {
  func.func @_mse_partial_kernel(%arg0: i32, %arg1: i32, %arg2: memref<2x1024xf32, #tpu.memory_space<vmem>>, %arg3: memref<2x1024xf32, #tpu.memory_space<vmem>>, %arg4: memref<1x1x1024xf32, #tpu.memory_space<vmem>>) attributes {dimension_semantics = [#tpu.dimension_semantics<parallel>, #tpu.dimension_semantics<arbitrary>], iteration_bounds = array<i64: 1, 1>, scalar_prefetch = 0 : i64, scratch_operands = 0 : i64, tpu.core_type = #tpu.core_type<tc>, window_params = [{transform_indices = @transform_0, window_bounds = array<i64: 2, 1024>}, {transform_indices = @transform_1, window_bounds = array<i64: 2, 1024>}, {transform_indices = @transform_2, window_bounds = array<i64: 1, 1, 1024>}]} {
    %c0_i32 = arith.constant 0 : i32
    %0 = arith.cmpi eq, %arg1, %c0_i32 : i32
    %1 = arith.extui %0 : i1 to i32
    %c0_i32_0 = arith.constant 0 : i32
    %2 = arith.cmpi ne, %1, %c0_i32_0 : i32
    scf.if %2 {
      %cst_10 = arith.constant 0.000000e+00 : f32
      %13 = vector.broadcast %cst_10 : f32 to vector<1x1x1024xf32>
      %c0_11 = arith.constant 0 : index
      %c0_12 = arith.constant 0 : index
      %c0_13 = arith.constant 0 : index
      %14 = vector.load %arg4[%c0_11, %c0_12, %c0_13] : memref<1x1x1024xf32, #tpu.memory_space<vmem>>, vector<1x1x1024xf32>
      tpu.vector_store %arg4[%c0_11, %c0_12, %c0_13], %13 {strides = array<i32>} : memref<1x1x1024xf32, #tpu.memory_space<vmem>>, vector<1x1x1024xf32>,
    } else {
    }
    %c0 = arith.constant 0 : index
    %c0_1 = arith.constant 0 : index
    %3 = vector.load %arg2[%c0, %c0_1] : memref<2x1024xf32, #tpu.memory_space<vmem>>, vector<2x1024xf32>
    %c0_2 = arith.constant 0 : index
    %c0_3 = arith.constant 0 : index
    %4 = vector.load %arg3[%c0_2, %c0_3] : memref<2x1024xf32, #tpu.memory_space<vmem>>, vector<2x1024xf32>
    %5 = arith.subf %3, %4 : vector<2x1024xf32>
    %6 = arith.mulf %5, %5 : vector<2x1024xf32>
    %c0_4 = arith.constant 0 : index
    %c0_5 = arith.constant 0 : index
    %c0_6 = arith.constant 0 : index
    %7 = vector.load %arg4[%c0_4, %c0_5, %c0_6] : memref<1x1x1024xf32, #tpu.memory_space<vmem>>, vector<1x1x1024xf32>
    %cst = arith.constant dense<0.000000e+00> : vector<1024xf32>
    %8 = vector.multi_reduction <add>, %6, %cst [0] : vector<2x1024xf32> to vector<1024xf32>
    %9 = vector.shape_cast %8 : vector<1024xf32> to vector<1x1024xf32>
    %10 = vector.shape_cast %9 : vector<1x1024xf32> to vector<1x1x1024xf32>
    %11 = arith.addf %7, %10 : vector<1x1x1024xf32>
    %c0_7 = arith.constant 0 : index
    %c0_8 = arith.constant 0 : index
    %c0_9 = arith.constant 0 : index
    %12 = vector.load %arg4[%c0_7, %c0_8, %c0_9] : memref<1x1x1024xf32, #tpu.memory_space<vmem>>, vector<1x1x1024xf32>
    tpu.vector_store %arg4[%c0_7, %c0_8, %c0_9], %11 {strides = array<i32>} : memref<1x1x1024xf32, #tpu.memory_space<vmem>>, vector<1x1x1024xf32>,
    return
  }
  func.func @transform_0(%arg0: i32, %arg1: i32) -> (i32, i32) {
    %c1_i32 = arith.constant 1 : i32
    %0 = arith.muli %arg0, %c1_i32 : i32
    %1 = arith.addi %0, %arg1 : i32
    %c0_i32 = arith.constant 0 : i32
    %2 = arith.minsi %1, %c0_i32 : i32
    %c0_i32_0 = arith.constant 0 : i32
    %c0_i32_1 = arith.constant 0 : i32
    return %2, %c0_i32_0 : i32, i32
  }
  func.func @transform_1(%arg0: i32, %arg1: i32) -> (i32, i32) {
    %c1_i32 = arith.constant 1 : i32
    %0 = arith.muli %arg0, %c1_i32 : i32
    %1 = arith.addi %0, %arg1 : i32
    %c0_i32 = arith.constant 0 : i32
    %2 = arith.minsi %1, %c0_i32 : i32
    %c0_i32_0 = arith.constant 0 : i32
    %c0_i32_1 = arith.constant 0 : i32
    return %2, %c0_i32_0 : i32, i32
  }
  func.func @transform_2(%arg0: i32, %arg1: i32) -> (i32, i32, i32) {
    %c0_i32 = arith.constant 0 : i32
    %c0_i32_0 = arith.constant 0 : i32
    %c0_i32_1 = arith.constant 0 : i32
    return %arg0, %c0_i32, %c0_i32_0 : i32, i32, i32
  }
}

</mosaic_0001>

<llo_original>
// kernel: mse_loss.1
$region0: #{mse_loss.1}
  #allocation0 [shape = 'u32[]', space=smem, size = 0x4, offset = 0x4, fixed_abs, tag = 'smem constant byte address 0x4 - core index']
  #allocation1 [shape = 'u32[144,128]{1,0:T(1,128)}', space=vmem, size = 0x12000, scoped, tag = 'internal scratch']
  %s0 = inlined_call_operand.vmem [shape: f32[2,1024], index: 0, kind: input, shape index: {}]
  %s1 = inlined_call_operand.vmem [shape: f32[2,1024], index: 1, kind: input, shape index: {}]
  %s2 = inlined_call_operand.vmem [shape: f32[1,1,1024], index: 2, kind: output, shape index: {}]
  %s3 = sld [smem:[#allocation0]]
  $region22: #{mse_loss.1} parent=0
    _
  %s5 = ssub.s32 1, %s3
  %s6 = scalar_select 0, %s5, %s3
  // Predicated region
  $region2: #{mse_loss.1} parent=0 // pred_check
    _
  $region3: #{mse_loss.1} parent=0 // pred_check_branch
    %8 = sbr.rel (0) target = $region5
  $region4: #{mse_loss.1} parent=0 // pred_region
    %s9 = sadd.s32 0, 0
    %p10 = scmp.lt.s32.totalorder %s9, 0
    %s11 = scalar_select %p10, %s9, 0
    %p12 = scmp.lt.s32.totalorder %s11, 0
    %s13 = scalar_select %p12, %s11, 0
    %s14 = smul.addr %s13, 8
    %s15 = smul.addr %s14, 2
    %s16 = scalar_lea.vmem %s0, %s15
    %s17 = sadd.s32 0, 0
    %p18 = scmp.lt.s32.totalorder %s17, 0
    %s19 = scalar_select %p18, %s17, 0
  $region5: #{mse_loss.1} parent=0 // pred_fallthru
    _
  // Predicated region
  $region6: #{mse_loss.1} parent=0 // pred_check
    _
  $region7: #{mse_loss.1} parent=0 // pred_check_branch
    %21 = sbr.rel (0) target = $region9
  $region8: #{mse_loss.1} parent=0 // pred_region
    %s22 = sadd.s32 0, 0
    %p23 = scmp.lt.s32.totalorder %s22, 0
    %s24 = scalar_select %p23, %s22, 0
    %p25 = scmp.lt.s32.totalorder %s24, 0
    %s26 = scalar_select %p25, %s24, 0
    %s27 = smul.addr %s26, 8
    %s28 = smul.addr %s27, 2
    %s29 = scalar_lea.vmem %s1, %s28
    %s30 = sadd.s32 0, 0
    %p31 = scmp.lt.s32.totalorder %s30, 0
    %s32 = scalar_select %p31, %s30, 0
  $region9: #{mse_loss.1} parent=0 // pred_fallthru
    _
  %s33 = sadd.s32 0, 0
  %p34 = scmp.lt.s32.totalorder %s33, 0
  %s35 = scalar_select %p34, %s33, 0
  %p36 = scmp.lt.s32.totalorder %s35, 0
  %s37 = scalar_select %p36, %s35, 0
  %s38 = smul.addr %s37, 8
  %s39 = smul.addr %s38, 2
  %s40 = scalar_lea.vmem %s0, %s39
  %s41 = sadd.s32 0, 0
  %p42 = scmp.lt.s32.totalorder %s41, 0
  %s43 = scalar_select %p42, %s41, 0
  %p44 = scmp.lt.s32.totalorder %s43, 0
  %s45 = scalar_select %p44, %s43, 0
  %s46 = smul.addr %s45, 8
  %s47 = smul.addr %s46, 2
  %s48 = scalar_lea.vmem %s1, %s47
  %s49 = sadd.s32 0, 0
  %p50 = scmp.lt.s32.totalorder %s49, 0
  %s51 = scalar_select %p50, %s49, 0
  %p52 = scmp.lt.s32.totalorder %s51, 0
  %s53 = scalar_select %p52, %s51, 0
  %s54 = smul.addr %s53, 8
  %s55 = smul.addr %s54, 2
  %s56 = scalar_lea.vmem %s0, %s55
  %s57 = sadd.s32 0, 0
  %p58 = scmp.lt.s32.totalorder %s57, 0
  %s59 = scalar_select %p58, %s57, 0
  %s60 = sadd.s32 0, 0
  %p61 = scmp.lt.s32.totalorder %s60, 0
  %s62 = scalar_select %p61, %s60, 0
  %p63 = scmp.lt.s32.totalorder %s62, 0
  %s64 = scalar_select %p63, %s62, 0
  %s65 = smul.addr %s64, 8
  %s66 = smul.addr %s65, 2
  %s67 = scalar_lea.vmem %s1, %s66
  %s68 = sadd.s32 0, 0
  %p69 = scmp.lt.s32.totalorder %s68, 0
  %s70 = scalar_select %p69, %s68, 0
  %p71 = scmp.eq.s32.totalorder 0, 0
  // Predicated region
  $region10: #{mse_loss.1} parent=0 // pred_check
    %p72 = pneg %p71
  $region11: #{mse_loss.1} parent=0 // pred_check_branch
    %74 = sbr.rel (%p72) target = $region13
  $region12: #{mse_loss.1} parent=0 // pred_region
    %75 = vst [vmem:[%s2] sm:$0xff] 0.0
  $region13: #{mse_loss.1} parent=0 // pred_fallthru
    _
  %v76 = vld [vmem:[%s56] sm:$0xff]
  %v77 = vld [vmem:[%s56 + $0x8] sm:$0xff]
  %v78 = vld [vmem:[%s67] sm:$0xff]
  %v79 = vld [vmem:[%s67 + $0x8] sm:$0xff]
  %v80 = vsub.f32 %v76, %v78
  %v81 = vsub.f32 %v77, %v79
  %v82 = vmul.f32 %v80, %v80
  %v83 = vmul.f32 %v81, %v81
  %v84 = vld [vmem:[%s2] sm:$0xff]
  %v87 = vcombine.high %v82, %v82
  %v89 = vunpack.c.l.s4 1983009808
  %v90 = vunpack.c.0.s8 %v89
  %v91 = vlaneseq
  %v92 = vshrl.u32 %v91, 7
  %v93 = vsub.s32 %v90, %v92
  %v94 = vrot.slane %v82, %v93
  %v96 = vunpack.c.l.s4 1983009808
  %v97 = vunpack.c.0.s8 %v96
  %v98 = vlaneseq
  %v99 = vshrl.u32 %v98, 7
  %v100 = vsub.s32 %v97, %v99
  %v101 = vrot.slane %v87, %v100
  %v102 = vcombine.high %v94, %v94
  %v103 = vcombine.high %v101, %v101
  %v104 = vcombine.high %v83, %v83
  %v106 = vunpack.c.l.s4 1983009808
  %v107 = vunpack.c.0.s8 %v106
  %v108 = vlaneseq
  %v109 = vshrl.u32 %v108, 7
  %v110 = vsub.s32 %v107, %v109
  %v111 = vrot.slane %v83, %v110
  %v113 = vunpack.c.l.s4 1983009808
  %v114 = vunpack.c.0.s8 %v113
  %v115 = vlaneseq
  %v116 = vshrl.u32 %v115, 7
  %v117 = vsub.s32 %v114, %v116
  %v118 = vrot.slane %v104, %v117
  %v119 = vcombine.high %v111, %v111
  %v120 = vcombine.high %v118, %v118
  %vm129 = vcmask 1041408
  %v130 = vsel %vm129, %v94, 0.0
  %v131 = vrot.slane %v130, 4
  %v132 = vadd.f32 %v130, %v131
  %v133 = vrot.slane %v132, 2
  %v134 = vadd.f32 %v132, %v133
  %v135 = vrot.slane %v134, 1
  %v136 = vadd.f32 %v134, %v135
  %v137 = vsel %vm129, %v102, 0.0
  %v138 = vrot.slane %v137, 4
  %v139 = vadd.f32 %v137, %v138
  %v140 = vrot.slane %v139, 2
  %v141 = vadd.f32 %v139, %v140
  %v142 = vrot.slane %v141, 1
  %v143 = vadd.f32 %v141, %v142
  %v144 = vsel %vm129, %v101, 0.0
  %v145 = vrot.slane %v144, 4
  %v146 = vadd.f32 %v144, %v145
  %v147 = vrot.slane %v146, 2
  %v148 = vadd.f32 %v146, %v147
  %v149 = vrot.slane %v148, 1
  %v150 = vadd.f32 %v148, %v149
  %v151 = vsel %vm129, %v103, 0.0
  %v152 = vrot.slane %v151, 4
  %v153 = vadd.f32 %v151, %v152
  %v154 = vrot.slane %v153, 2
  %v155 = vadd.f32 %v153, %v154
  %v156 = vrot.slane %v155, 1
  %v157 = vadd.f32 %v155, %v156
  %v158 = vsel %vm129, %v111, 0.0
  %v159 = vrot.slane %v158, 4
  %v160 = vadd.f32 %v158, %v159
  %v161 = vrot.slane %v160, 2
  %v162 = vadd.f32 %v160, %v161
  %v163 = vrot.slane %v162, 1
  %v164 = vadd.f32 %v162, %v163
  %v165 = vsel %vm129, %v119, 0.0
  %v166 = vrot.slane %v165, 4
  %v167 = vadd.f32 %v165, %v166
  %v168 = vrot.slane %v167, 2
  %v169 = vadd.f32 %v167, %v168
  %v170 = vrot.slane %v169, 1
  %v171 = vadd.f32 %v169, %v170
  %v172 = vsel %vm129, %v118, 0.0
  %v173 = vrot.slane %v172, 4
  %v174 = vadd.f32 %v172, %v173
  %v175 = vrot.slane %v174, 2
  %v176 = vadd.f32 %v174, %v175
  %v177 = vrot.slane %v176, 1
  %v178 = vadd.f32 %v176, %v177
  %v179 = vsel %vm129, %v120, 0.0
  %v180 = vrot.slane %v179, 4
  %v181 = vadd.f32 %v179, %v180
  %v182 = vrot.slane %v181, 2
  %v183 = vadd.f32 %v181, %v182
  %v184 = vrot.slane %v183, 1
  %v185 = vadd.f32 %v183, %v184
  %v194 = vcombine.low %v136, %v143
  %v195 = vcombine.low %v150, %v157
  %v196 = vcombine.low %v164, %v171
  %v197 = vcombine.low %v178, %v185
  %v199 = vunpack.c.l.s4 1966171168
  %v200 = vunpack.c.0.s8 %v199
  %v201 = vlaneseq
  %v202 = vshrl.u32 %v201, 7
  %v203 = vsub.s32 %v200, %v202
  %v204 = vrot.slane %v194, %v203
  %v206 = vunpack.c.l.s4 1966171168
  %v207 = vunpack.c.0.s8 %v206
  %v208 = vlaneseq
  %v209 = vshrl.u32 %v208, 7
  %v210 = vsub.s32 %v207, %v209
  %v211 = vrot.slane %v195, %v210
  %v213 = vunpack.c.l.s4 1966171168
  %v214 = vunpack.c.0.s8 %v213
  %v215 = vlaneseq
  %v216 = vshrl.u32 %v215, 7
  %v217 = vsub.s32 %v214, %v216
  %v218 = vrot.slane %v196, %v217
  %v220 = vunpack.c.l.s4 1966171168
  %v221 = vunpack.c.0.s8 %v220
  %v222 = vlaneseq
  %v223 = vshrl.u32 %v222, 7
  %v224 = vsub.s32 %v221, %v223
  %v225 = vrot.slane %v197, %v224
  %v226 = vcombine.low %v204, %v211
  %v227 = vcombine.low %v218, %v225
  %v229 = vunpack.c.l.s4 1966171168
  %v230 = vunpack.c.0.s8 %v229
  %v231 = vlaneseq
  %v232 = vshrl.u32 %v231, 7
  %v233 = vsub.s32 %v230, %v232
  %v234 = vrot.slane %v226, %v233
  %v236 = vunpack.c.l.s4 1966171168
  %v237 = vunpack.c.0.s8 %v236
  %v238 = vlaneseq
  %v239 = vshrl.u32 %v238, 7
  %v240 = vsub.s32 %v237, %v239
  %v241 = vrot.slane %v227, %v240
  %v242 = vcombine.low %v234, %v241
  %v244 = vadd.f32 %v84, %v242
  %245 = vst [vmem:[%s2] sm:$0xff] %v244
  // Predicated region
  $region14: #{mse_loss.1} parent=0 // pred_check
    _
  $region15: #{mse_loss.1} parent=0 // pred_check_branch
    %247 = sbr.rel (0) target = $region17
  $region16: #{mse_loss.1} parent=0 // pred_region
    _
  $region17: #{mse_loss.1} parent=0 // pred_fallthru
    _
  // Predicated region
  $region18: #{mse_loss.1} parent=0 // pred_check
    _
  $region19: #{mse_loss.1} parent=0 // pred_check_branch
    %249 = sbr.rel (0) target = $region21
  $region20: #{mse_loss.1} parent=0 // pred_region
    _
  $region21: #{mse_loss.1} parent=0 // pred_fallthru
    _

</llo_original>
